<compile_context>
chip_gen: v5e
topology: v5e:2x2
jax: 0.10.0
libtpu: 0.0.40
codegen_flags: <defaults>
</compile_context>

<pallas_src>
import jax
import jax.numpy as jnp
from jax.experimental import pallas as pl
from jax.experimental.pallas import tpu as pltpu


def _round_up(x, m):
    return (x + m - 1) // m * m


def _logistic_kernel(x_ref, w_ref, b_ref, o_ref):
    # x_ref: (TN, W) streamed VMEM tile      w_ref: (W, F) VMEM, resident
    # b_ref: (1,)    SMEM scalar             o_ref: (TN, F) VMEM
    z = jnp.dot(x_ref[...], w_ref[...], preferred_element_type=jnp.float32)
    o_ref[...] = jax.nn.sigmoid(z + b_ref[0]).astype(o_ref.dtype)


def _fold_factor(n, d):
    """Largest F with F*D <= 128 lanes and N % F == 0 (F = 1 always valid)."""
    if d >= 128 or n <= 0:
        return 1
    for f in range(min(128 // d, n), 0, -1):
        if n % f == 0:
            return f
    return 1


def _vmem_budgets():
    phys = 128 << 20                     # v5e / v6e physical VMEM per core
    try:
        phys = int(getattr(pltpu.get_tpu_info(), "vmem_capacity_bytes", phys))
    except Exception:
        pass
    # Per pipeline-buffer budget (x tile + its lane-padded out tile); each is
    # double-buffered by Pallas.  128 MiB (v5e/v6e) and 64 MiB (v7x) both give
    # ~8 MiB x-tiles, which amortize the ~0.35 us per-step overhead.
    per_buf = min(16 << 20, max(2 << 20, phys // 4))
    return per_buf, phys


def _choose_tile_rows(nr, bytes_per_row, per_buf_budget):
    if nr <= 8:
        return nr                        # one full-array block (always legal)
    budget_rows = max(8, (per_buf_budget // bytes_per_row) // 8 * 8)
    # Keep >= 2 row blocks so the "parallel" grid axis can feed both v7x
    # TensorCores and the input pipeline always has something to overlap.
    half = _round_up(pl.cdiv(nr, 2), 8)
    return max(8, min(budget_rows, half))


@jax.jit
def logistic_forward(x, w, b):
    """sigmoid(x @ w.T + b).squeeze()   x: (N, D) f32, w: (1, D), b: (1,) -> (N,)"""
    n, d = x.shape
    wv = w.reshape(d)
    bv = b.reshape(1)

    f = _fold_factor(n, d)
    width = f * d                        # packed lane width (128 when it folds)
    nr = n // f                          # packed row count

    # Free contiguous reshape: row r of xr holds original rows r*F .. r*F+F-1.
    xr = x.reshape(nr, width)
    # Block-diagonal weight: wf[g*D + k, g] = w[k]  =>  (xr @ wf)[r, g] = z[r*F+g].
    eye = jnp.eye(f, dtype=wv.dtype)
    wf = (eye[:, None, :] * wv[None, :, None]).reshape(width, f)

    per_buf_budget, phys_vmem = _vmem_budgets()
    x_row_bytes = 4 * _round_up(width, 128)     # lane-padded f32 row in VMEM
    o_row_bytes = 4 * _round_up(f, 128)         # output rows also pad to 128 lanes
    tn = _choose_tile_rows(nr, x_row_bytes + o_row_bytes, per_buf_budget)
    grid_n = pl.cdiv(nr, tn)

    # Explicit scoped-VMEM limit covering the double-buffered working set.
    tn_pad = _round_up(tn, 8)
    need = (2 * tn_pad * (x_row_bytes + o_row_bytes)
            + 2 * _round_up(width, 8) * o_row_bytes      # resident weight (tiny)
            + (2 << 20))                                  # headroom / scratch
    vmem_limit = int(min(phys_vmem * 3 // 4, max(need, 16 << 20)))

    out = pl.pallas_call(
        _logistic_kernel,
        out_shape=jax.ShapeDtypeStruct((nr, f), jnp.float32),
        grid_spec=pltpu.PrefetchScalarGridSpec(
            num_scalar_prefetch=0,
            grid=(grid_n,),
            in_specs=[
                # x: streamed row tiles, auto double-buffered; ragged last block OK.
                pl.BlockSpec((tn, width), lambda i: (i, 0)),
                # packed weight: same block every step -> fetched once, resident.
                pl.BlockSpec((width, f), lambda i: (0, 0)),
                # bias: single scalar, keep it in SMEM.
                pl.BlockSpec(memory_space=pltpu.MemorySpace.SMEM),
            ],
            out_specs=pl.BlockSpec((tn, f), lambda i: (i, 0)),
        ),
        compiler_params=pltpu.CompilerParams(
            dimension_semantics=("parallel",),
            vmem_limit_bytes=vmem_limit,
        ),
    )(xr, wf, bv)
    # (nr, F) -> (N,): flat index r*F + g is exactly the original row index.
    return out.reshape(n)


def reference_forward(x, w, b):
    return jax.nn.sigmoid(x @ w.T + b).reshape(x.shape[0])


if __name__ == "__main__":
    key = jax.random.PRNGKey(0)
    kx, kw, kb, kx2, kx3 = jax.random.split(key, 5)

    # Shapes matching the module: nn.Linear(dim_in=32, 1), batch N=8.
    dim_in = 32
    bound = 1.0 / (dim_in ** 0.5)        # torch-style nn.Linear init range
    w = jax.random.uniform(kw, (1, dim_in), minval=-bound, maxval=bound,
                           dtype=jnp.float32)
    b = jax.random.uniform(kb, (1,), minval=-bound, maxval=bound,
                           dtype=jnp.float32)

    x = jax.random.normal(kx, (8, dim_in), dtype=jnp.float32)
    y = jax.block_until_ready(logistic_forward(x, w, b))
    assert y.shape == (8,)
    assert jnp.allclose(y, reference_forward(x, w, b), atol=1e-5, rtol=1e-5)

    # Multi-tile path: exercises the row grid and the ragged last block.
    x2 = jax.random.normal(kx2, (2500, dim_in), dtype=jnp.float32)
    y2 = jax.block_until_ready(logistic_forward(x2, w, b))
    assert y2.shape == (2500,)
    assert jnp.allclose(y2, reference_forward(x2, w, b), atol=1e-5, rtol=1e-5)

    # N with no usable fold factor: exercises the F=1 (unfolded) fallback path.
    x3 = jax.random.normal(kx3, (11, dim_in), dtype=jnp.float32)
    y3 = jax.block_until_ready(logistic_forward(x3, w, b))
    assert y3.shape == (11,)
    assert jnp.allclose(y3, reference_forward(x3, w, b), atol=1e-5, rtol=1e-5)

    print("KERNEL_OK")
</pallas_src>

<mosaic_0001>
module attributes {stable_mosaic.version = 11 : i64} {
  func.func @_logistic_kernel(%arg0: i32, %arg1: memref<2x128xf32, #tpu.memory_space<vmem>>, %arg2: memref<128x4xf32, #tpu.memory_space<vmem>>, %arg3: memref<1xf32, #tpu.memory_space<smem>>, %arg4: memref<2x4xf32, #tpu.memory_space<vmem>>) attributes {dimension_semantics = [#tpu.dimension_semantics<parallel>], iteration_bounds = array<i64: 1>, scalar_prefetch = 0 : i64, scratch_operands = 0 : i64, tpu.core_type = #tpu.core_type<tc>, window_params = [{transform_indices = @transform_0, window_bounds = array<i64: 2, 128>}, {pipeline_mode = #tpu.pipeline_mode<synchronous>, transform_indices = @transform_1, window_bounds = array<i64: 128, 4>}, {transform_indices = @transform_2, window_bounds = array<i64: 1>}, {transform_indices = @transform_3, window_bounds = array<i64: 2, 4>}]} {
    %c0 = arith.constant 0 : index
    %c0_0 = arith.constant 0 : index
    %0 = vector.load %arg1[%c0, %c0_0] : memref<2x128xf32, #tpu.memory_space<vmem>>, vector<2x128xf32>
    %c0_1 = arith.constant 0 : index
    %c0_2 = arith.constant 0 : index
    %1 = vector.load %arg2[%c0_1, %c0_2] : memref<128x4xf32, #tpu.memory_space<vmem>>, vector<128x4xf32>
    %cst = arith.constant dense<0.000000e+00> : vector<2x4xf32>
    %2 = tpu.matmul %0, %1, %cst {dimension_numbers = #tpu.dot_dimension_numbers<[1], [0], [0], [1], [0, 0, 1, 1], [], []>} : vector<2x128xf32>, vector<128x4xf32>, vector<2x4xf32> -> vector<2x4xf32>
    %c0_3 = arith.constant 0 : index
    %3 = memref.load %arg3[%c0_3] : memref<1xf32, #tpu.memory_space<smem>>
    %4 = vector.broadcast %3 : f32 to vector<2x4xf32>
    %5 = arith.addf %2, %4 : vector<2x4xf32>
    %6 = arith.negf %5 : vector<2x4xf32>
    %7 = math.exp %6 : vector<2x4xf32>
    %cst_4 = arith.constant 1.000000e+00 : f32
    %8 = vector.broadcast %cst_4 : f32 to vector<2x4xf32>
    %9 = arith.addf %8, %7 : vector<2x4xf32>
    %10 = arith.divf %8, %9 : vector<2x4xf32>
    %c0_5 = arith.constant 0 : index
    %c0_6 = arith.constant 0 : index
    %11 = vector.load %arg4[%c0_5, %c0_6] : memref<2x4xf32, #tpu.memory_space<vmem>>, vector<2x4xf32>
    tpu.vector_store %arg4[%c0_5, %c0_6], %10 {strides = array<i32>} : memref<2x4xf32, #tpu.memory_space<vmem>>, vector<2x4xf32>,
    return
  }
  func.func @transform_0(%arg0: i32) -> (i32, i32) {
    %c0_i32 = arith.constant 0 : i32
    %c0_i32_0 = arith.constant 0 : i32
    return %arg0, %c0_i32 : i32, i32
  }
  func.func @transform_1(%arg0: i32) -> (i32, i32) {
    %c0_i32 = arith.constant 0 : i32
    %c0_i32_0 = arith.constant 0 : i32
    %c0_i32_1 = arith.constant 0 : i32
    return %c0_i32, %c0_i32_0 : i32, i32
  }
  func.func @transform_2(%arg0: i32) -> i32 {
    %c0_i32 = arith.constant 0 : i32
    %c0_i32_0 = arith.constant 0 : i32
    return %c0_i32 : i32
  }
  func.func @transform_3(%arg0: i32) -> (i32, i32) {
    %c0_i32 = arith.constant 0 : i32
    %c0_i32_0 = arith.constant 0 : i32
    return %arg0, %c0_i32 : i32, i32
  }
}

</mosaic_0001>

<llo_original>
// kernel: logistic_forward.1
$region0: #{logistic_forward.1}
  #allocation0 [shape = 'u32[]', space=smem, size = 0x4, offset = 0x4, fixed_abs, tag = 'smem constant byte address 0x4 - core index']
  #allocation1 [shape = 'u32[72,128]{1,0:T(1,128)}', space=vmem, size = 0x9000, scoped, tag = 'internal scratch']
  #allocation2 [shape = 'f32[1]{0:T(128)S(6)}', space=smem, size = 0x200, scoped, tag = 'scoped memory for logistic_forward.1']
  %s0 = inlined_call_operand.vmem [shape: f32[2,128], index: 0, kind: input, shape index: {}]
  %s1 = inlined_call_operand.vmem [shape: f32[128,4], index: 1, kind: input, shape index: {}]
  %s2 = inlined_call_operand.<no memory space> [shape: f32[1], index: 2, kind: input, shape index: {}]
  %s3 = inlined_call_operand.vmem [shape: f32[2,4], index: 3, kind: output, shape index: {}]
  %s4 = sld [smem:[#allocation0]]
  $region22: #{logistic_forward.1} parent=0
    _
  %s6 = ssub.s32 1, %s4
  %s7 = scalar_select 0, %s6, %s4
  %8 = sst [smem:[#allocation2]] %s2
  // Predicated region
  $region2: #{logistic_forward.1} parent=0 // pred_check
    _
  $region3: #{logistic_forward.1} parent=0 // pred_check_branch
    %10 = sbr.rel (0) target = $region5
  $region4: #{logistic_forward.1} parent=0 // pred_region
    _
  $region5: #{logistic_forward.1} parent=0 // pred_fallthru
    _
  // Predicated region
  $region6: #{logistic_forward.1} parent=0 // pred_check
    _
  $region7: #{logistic_forward.1} parent=0 // pred_check_branch
    %12 = sbr.rel (0) target = $region9
  $region8: #{logistic_forward.1} parent=0 // pred_region
    _
  $region9: #{logistic_forward.1} parent=0 // pred_fallthru
    _
  // Predicated region
  $region10: #{logistic_forward.1} parent=0 // pred_check
    _
  $region11: #{logistic_forward.1} parent=0 // pred_check_branch
    %14 = sbr.rel (0) target = $region13
  $region12: #{logistic_forward.1} parent=0 // pred_region
    _
  $region13: #{logistic_forward.1} parent=0 // pred_fallthru
    _
  %v15 = vld [vmem:[%s0] sm:$0x3]
  %v16 = vld [vmem:[%s1] sm:$0xff]
  %v17 = vld [vmem:[%s1 + $0x8] sm:$0xff]
  %v18 = vld [vmem:[%s1 + $0x10] sm:$0xff]
  %v19 = vld [vmem:[%s1 + $0x18] sm:$0xff]
  %v20 = vld [vmem:[%s1 + $0x20] sm:$0xff]
  %v21 = vld [vmem:[%s1 + $0x28] sm:$0xff]
  %v22 = vld [vmem:[%s1 + $0x30] sm:$0xff]
  %v23 = vld [vmem:[%s1 + $0x38] sm:$0xff]
  %v24 = vld [vmem:[%s1 + $0x40] sm:$0xff]
  %v25 = vld [vmem:[%s1 + $0x48] sm:$0xff]
  %v26 = vld [vmem:[%s1 + $0x50] sm:$0xff]
  %v27 = vld [vmem:[%s1 + $0x58] sm:$0xff]
  %v28 = vld [vmem:[%s1 + $0x60] sm:$0xff]
  %v29 = vld [vmem:[%s1 + $0x68] sm:$0xff]
  %v30 = vld [vmem:[%s1 + $0x70] sm:$0xff]
  %v31 = vld [vmem:[%s1 + $0x78] sm:$0xff]
  %s32 = sld [smem:[#allocation2]]
  %v33 = vstv %s32
  %34 = vmatpush.msra.mxu0 %v31
  %35 = vmatpush.msra.mxu0 %v30
  %36 = vmatpush.msra.mxu0 %v29
  %37 = vmatpush.msra.mxu0 %v28
  %38 = vmatpush.msra.mxu0 %v27
  %39 = vmatpush.msra.mxu0 %v26
  %40 = vmatpush.msra.mxu0 %v25
  %41 = vmatpush.msra.mxu0 %v24
  %42 = vmatpush.msra.mxu0 %v23
  %43 = vmatpush.msra.mxu0 %v22
  %44 = vmatpush.msra.mxu0 %v21
  %45 = vmatpush.msra.mxu0 %v20
  %46 = vmatpush.msra.mxu0 %v19
  %47 = vmatpush.msra.mxu0 %v18
  %48 = vmatpush.msra.mxu0 %v17
  %49 = vmatpush.msra.mxu0 %v16
  %50 = vmatmul.f32.gmra.mxu0 %v15
  %v51 = vpop.f32.mrf.mxu0
  %v52 = vadd.f32 %v33, %v51
  %53 = vdwg.mxu0
  %v54 = vxor.u32 %v52, 2147483648
  %v55 = vmul.f32 %v54, 1.442695
  %v56 = vpow.pop %v55
  %v57 = vadd.f32 %v56, 1.0
  %v58 = vrcp.pop %v57
  %v59 = vmul.f32 %v57, %v58
  %v60 = vsub.f32 1.0, %v59
  %v61 = vmul.f32 %v58, %v60
  %v62 = vadd.f32 %v58, %v61
  %vm63 = vweird.f32 %v57
  %vm64 = vweird.f32 %v58
  %vm65 = vmor %vm63, %vm64
  %v66 = vsel %vm65, %v58, %v62
  %v67 = vand.u32 2147483647, %v57
  %vm68 = vcmp.eq.f32.partialorder %v67, 8.507059e+37
  %v69 = vand.u32 %v57, 2147483648
  %v70 = vor.u32 1.1754944e-38, %v69
  %v71 = vsel %vm68, %v70, %v66
  %v72 = vmul.f32 1.0, %v71
  %vm73 = vcmask 25600
  %74 = vst.msk [vmem:[%s3] sm:$0x3] %vm73, %v72
  // Predicated region
  $region14: #{logistic_forward.1} parent=0 // pred_check
    _
  $region15: #{logistic_forward.1} parent=0 // pred_check_branch
    %76 = sbr.rel (0) target = $region17
  $region16: #{logistic_forward.1} parent=0 // pred_region
    _
  $region17: #{logistic_forward.1} parent=0 // pred_fallthru
    _
  // Predicated region
  $region18: #{logistic_forward.1} parent=0 // pred_check
    _
  $region19: #{logistic_forward.1} parent=0 // pred_check_branch
    %78 = sbr.rel (0) target = $region21
  $region20: #{logistic_forward.1} parent=0 // pred_region
    _
  $region21: #{logistic_forward.1} parent=0 // pred_fallthru
    _

</llo_original>
